<compile_context>
chip_gen: v6e
topology: v6e:2x2x1
jax: 0.10.0
libtpu: 0.0.40
codegen_flags: <defaults>
</compile_context>

<pallas_src>
import jax
import jax.numpy as jnp
from jax.experimental import pallas as pl
from jax.experimental.pallas import tpu as pltpu

H_PAD = 128    # lane-dense hidden width (one full vreg lane group / v5e MXU tile)
OUT_PAD = 128  # lane-dense output width; real output is column 0


def pinn_kernel(x_ref, w_in_ref, b_in_ref, w_mid_ref, b_mid_ref,
                w_out_ref, b_out_ref, o_ref):
    # x_ref:     (TN, 1)
    # w_in_ref:  (1, H_PAD)        b_in_ref:  (1, H_PAD)
    # w_mid_ref: (M, H_PAD, H_PAD) b_mid_ref: (M, 1, H_PAD)
    # w_out_ref: (H_PAD, OUT_PAD)  b_out_ref: (1, OUT_PAD)
    # o_ref:     (TN, OUT_PAD)   (only column 0 is meaningful)
    x = x_ref[...]  # (TN, 1)

    # Input layer on the VPU: (TN,1) * (1,H) broadcast instead of a K=1 MXU matmul.
    out = jnp.tanh(x * w_in_ref[...] + b_in_ref[...])  # (TN, H_PAD), f32

    # Middle layers: full 128-wide MXU matmuls, f32 accumulation, static unroll.
    num_mid = w_mid_ref.shape[0]
    for l in range(num_mid):
        out = jnp.tanh(
            jnp.dot(out, w_mid_ref[l], preferred_element_type=jnp.float32)
            + b_mid_ref[l]
        )

    # Output layer, lane-dense (padded) store.
    o_ref[...] = (
        jnp.dot(out, w_out_ref[...], preferred_element_type=jnp.float32)
        + b_out_ref[...]
    )


def pinn_forward(x, padded_params, *, tile_n=128):
    """x: (N, 1) float32. padded_params: dict of zero-padded, pre-transposed params."""
    N = x.shape[0]
    w_mid = padded_params["w_mid"]
    b_mid = padded_params["b_mid"]

    n_blocks = pl.cdiv(N, tile_n)
    n_pad = n_blocks * tile_n
    if n_pad != N:
        x = jnp.pad(x, ((0, n_pad - N), (0, 0)))

    out_padded = pl.pallas_call(
        pinn_kernel,
        out_shape=jax.ShapeDtypeStruct((n_pad, OUT_PAD), jnp.float32),
        grid_spec=pltpu.PrefetchScalarGridSpec(
            num_scalar_prefetch=0,
            grid=(n_blocks,),
            in_specs=[
                pl.BlockSpec((tile_n, 1), lambda i: (i, 0)),          # x (tiled)
                pl.BlockSpec((1, H_PAD), lambda i: (0, 0)),           # w_in (resident)
                pl.BlockSpec((1, H_PAD), lambda i: (0, 0)),           # b_in
                pl.BlockSpec(w_mid.shape, lambda i: (0, 0, 0)),       # w_mid
                pl.BlockSpec(b_mid.shape, lambda i: (0, 0, 0)),       # b_mid
                pl.BlockSpec((H_PAD, OUT_PAD), lambda i: (0, 0)),     # w_out
                pl.BlockSpec((1, OUT_PAD), lambda i: (0, 0)),         # b_out
            ],
            out_specs=pl.BlockSpec((tile_n, OUT_PAD), lambda i: (i, 0)),
        ),
        compiler_params=pltpu.CompilerParams(
            dimension_semantics=("parallel",),  # shard batch tiles across TCs on v7x
        ),
    )(x, padded_params["w_in"], padded_params["b_in"], w_mid, b_mid,
      padded_params["w_out"], padded_params["b_out"])

    # Slice back to the true (N, 1) result.
    return out_padded[:N, :1]


def init_params(key, num_hidden, dim_hidden):
    """Logical (unpadded) params mirroring the torch module, weights pre-transposed.

    torch Linear(in, out) has weight (out, in), bias (out,). We store (in, out)
    so the forward is x @ W + b.
    """
    assert num_hidden >= 2, "need at least one middle layer"
    H = dim_hidden
    M = num_hidden - 1
    k = jax.random.split(key, 6)
    return {
        "w_in":  jax.random.normal(k[0], (1, H), jnp.float32) * 0.5,
        "b_in":  jax.random.normal(k[1], (1, H), jnp.float32) * 0.1,
        "w_mid": jax.random.normal(k[2], (M, H, H), jnp.float32) * (1.0 / jnp.sqrt(H)),
        "b_mid": jax.random.normal(k[3], (M, 1, H), jnp.float32) * 0.1,
        "w_out": jax.random.normal(k[4], (H, 1), jnp.float32) * (1.0 / jnp.sqrt(H)),
        "b_out": jax.random.normal(k[5], (1, 1), jnp.float32) * 0.1,
    }


def pad_params(params):
    """Zero-pad hidden dim to H_PAD and output dim to OUT_PAD (lane-dense tiles).

    Zero-padded weight columns/rows + zero-padded biases keep the padded lanes at
    exactly 0 through every tanh (tanh(0)=0), so no leakage into the real output.
    """
    H = params["w_in"].shape[1]
    dh = H_PAD - H
    do = OUT_PAD - params["w_out"].shape[1]
    return {
        "w_in":  jnp.pad(params["w_in"],  ((0, 0), (0, dh))),
        "b_in":  jnp.pad(params["b_in"],  ((0, 0), (0, dh))),
        "w_mid": jnp.pad(params["w_mid"], ((0, 0), (0, dh), (0, dh))),
        "b_mid": jnp.pad(params["b_mid"], ((0, 0), (0, 0), (0, dh))),
        "w_out": jnp.pad(params["w_out"], ((0, dh), (0, do))),
        "b_out": jnp.pad(params["b_out"], ((0, 0), (0, do))),
    }


def pinn_reference(x, params):
    """Plain-JAX reference on the unpadded params (mirrors the torch forward)."""
    out = jnp.tanh(x @ params["w_in"] + params["b_in"])
    for l in range(params["w_mid"].shape[0]):
        out = jnp.tanh(out @ params["w_mid"][l] + params["b_mid"][l])
    return out @ params["w_out"] + params["b_out"]


if __name__ == "__main__":
    num_hidden = 3   # -> 2 middle layers
    dim_hidden = 32
    N = 300          # batch of collocation points (non-multiple of tile: exercises pad+slice)

    key = jax.random.PRNGKey(0)
    kx, kp = jax.random.split(key)
    params = init_params(kp, num_hidden, dim_hidden)
    padded = pad_params(params)
    x = jax.random.uniform(kx, (N, 1), jnp.float32)

    y = pinn_forward(x, padded, tile_n=128)
    y = jax.block_until_ready(y)

    y_ref = pinn_reference(x, params)
    assert y.shape == (N, 1)
    assert jnp.allclose(y, y_ref, atol=1e-4, rtol=1e-4), "mismatch vs reference"

    print("KERNEL_OK")
</pallas_src>

<mosaic_0001>
module attributes {stable_mosaic.version = 11 : i64} {
  func.func @pinn_kernel(%arg0: i32, %arg1: memref<128x1xf32, #tpu.memory_space<vmem>>, %arg2: memref<1x128xf32, #tpu.memory_space<vmem>>, %arg3: memref<1x128xf32, #tpu.memory_space<vmem>>, %arg4: memref<2x128x128xf32, #tpu.memory_space<vmem>>, %arg5: memref<2x1x128xf32, #tpu.memory_space<vmem>>, %arg6: memref<128x128xf32, #tpu.memory_space<vmem>>, %arg7: memref<1x128xf32, #tpu.memory_space<vmem>>, %arg8: memref<128x128xf32, #tpu.memory_space<vmem>>) attributes {dimension_semantics = [#tpu.dimension_semantics<parallel>], iteration_bounds = array<i64: 3>, scalar_prefetch = 0 : i64, scratch_operands = 0 : i64, tpu.core_type = #tpu.core_type<tc>, window_params = [{transform_indices = @transform_0, window_bounds = array<i64: 128, 1>}, {pipeline_mode = #tpu.pipeline_mode<synchronous>, transform_indices = @transform_1, window_bounds = array<i64: 1, 128>}, {pipeline_mode = #tpu.pipeline_mode<synchronous>, transform_indices = @transform_2, window_bounds = array<i64: 1, 128>}, {pipeline_mode = #tpu.pipeline_mode<synchronous>, transform_indices = @transform_3, window_bounds = array<i64: 2, 128, 128>}, {pipeline_mode = #tpu.pipeline_mode<synchronous>, transform_indices = @transform_4, window_bounds = array<i64: 2, 1, 128>}, {pipeline_mode = #tpu.pipeline_mode<synchronous>, transform_indices = @transform_5, window_bounds = array<i64: 128, 128>}, {pipeline_mode = #tpu.pipeline_mode<synchronous>, transform_indices = @transform_6, window_bounds = array<i64: 1, 128>}, {transform_indices = @transform_7, window_bounds = array<i64: 128, 128>}]} {
    %c0 = arith.constant 0 : index
    %c0_0 = arith.constant 0 : index
    %0 = vector.load %arg1[%c0, %c0_0] : memref<128x1xf32, #tpu.memory_space<vmem>>, vector<128x1xf32>
    %c0_1 = arith.constant 0 : index
    %c0_2 = arith.constant 0 : index
    %1 = vector.load %arg2[%c0_1, %c0_2] : memref<1x128xf32, #tpu.memory_space<vmem>>, vector<1x128xf32>
    %2 = vector.broadcast %0 : vector<128x1xf32> to vector<128x128xf32>
    %3 = vector.broadcast %1 : vector<1x128xf32> to vector<128x128xf32>
    %4 = arith.mulf %2, %3 : vector<128x128xf32>
    %c0_3 = arith.constant 0 : index
    %c0_4 = arith.constant 0 : index
    %5 = vector.load %arg3[%c0_3, %c0_4] : memref<1x128xf32, #tpu.memory_space<vmem>>, vector<1x128xf32>
    %6 = vector.broadcast %5 : vector<1x128xf32> to vector<128x128xf32>
    %7 = arith.addf %4, %6 : vector<128x128xf32>
    %8 = math.tanh %7 : vector<128x128xf32>
    %c0_5 = arith.constant 0 : index
    %c0_6 = arith.constant 0 : index
    %c0_7 = arith.constant 0 : index
    %9 = vector.load %arg4[%c0_5, %c0_6, %c0_7] : memref<2x128x128xf32, #tpu.memory_space<vmem>>, vector<1x128x128xf32>
    %10 = vector.shape_cast %9 : vector<1x128x128xf32> to vector<128x128xf32>
    %cst = arith.constant dense<0.000000e+00> : vector<128x128xf32>
    %11 = tpu.matmul %8, %10, %cst {dimension_numbers = #tpu.dot_dimension_numbers<[1], [0], [0], [1], [0, 0, 1, 1], [], []>} : vector<128x128xf32>, vector<128x128xf32>, vector<128x128xf32> -> vector<128x128xf32>
    %c0_8 = arith.constant 0 : index
    %c0_9 = arith.constant 0 : index
    %c0_10 = arith.constant 0 : index
    %12 = vector.load %arg5[%c0_8, %c0_9, %c0_10] : memref<2x1x128xf32, #tpu.memory_space<vmem>>, vector<1x1x128xf32>
    %13 = vector.shape_cast %12 : vector<1x1x128xf32> to vector<1x128xf32>
    %14 = vector.broadcast %13 : vector<1x128xf32> to vector<128x128xf32>
    %15 = arith.addf %11, %14 : vector<128x128xf32>
    %16 = math.tanh %15 : vector<128x128xf32>
    %c1 = arith.constant 1 : index
    %c0_11 = arith.constant 0 : index
    %c0_12 = arith.constant 0 : index
    %17 = vector.load %arg4[%c1, %c0_11, %c0_12] : memref<2x128x128xf32, #tpu.memory_space<vmem>>, vector<1x128x128xf32>
    %18 = vector.shape_cast %17 : vector<1x128x128xf32> to vector<128x128xf32>
    %cst_13 = arith.constant dense<0.000000e+00> : vector<128x128xf32>
    %19 = tpu.matmul %16, %18, %cst_13 {dimension_numbers = #tpu.dot_dimension_numbers<[1], [0], [0], [1], [0, 0, 1, 1], [], []>} : vector<128x128xf32>, vector<128x128xf32>, vector<128x128xf32> -> vector<128x128xf32>
    %c1_14 = arith.constant 1 : index
    %c0_15 = arith.constant 0 : index
    %c0_16 = arith.constant 0 : index
    %20 = vector.load %arg5[%c1_14, %c0_15, %c0_16] : memref<2x1x128xf32, #tpu.memory_space<vmem>>, vector<1x1x128xf32>
    %21 = vector.shape_cast %20 : vector<1x1x128xf32> to vector<1x128xf32>
    %22 = vector.broadcast %21 : vector<1x128xf32> to vector<128x128xf32>
    %23 = arith.addf %19, %22 : vector<128x128xf32>
    %24 = math.tanh %23 : vector<128x128xf32>
    %c0_17 = arith.constant 0 : index
    %c0_18 = arith.constant 0 : index
    %25 = vector.load %arg6[%c0_17, %c0_18] : memref<128x128xf32, #tpu.memory_space<vmem>>, vector<128x128xf32>
    %cst_19 = arith.constant dense<0.000000e+00> : vector<128x128xf32>
    %26 = tpu.matmul %24, %25, %cst_19 {dimension_numbers = #tpu.dot_dimension_numbers<[1], [0], [0], [1], [0, 0, 1, 1], [], []>} : vector<128x128xf32>, vector<128x128xf32>, vector<128x128xf32> -> vector<128x128xf32>
    %c0_20 = arith.constant 0 : index
    %c0_21 = arith.constant 0 : index
    %27 = vector.load %arg7[%c0_20, %c0_21] : memref<1x128xf32, #tpu.memory_space<vmem>>, vector<1x128xf32>
    %28 = vector.broadcast %27 : vector<1x128xf32> to vector<128x128xf32>
    %29 = arith.addf %26, %28 : vector<128x128xf32>
    %c0_22 = arith.constant 0 : index
    %c0_23 = arith.constant 0 : index
    %30 = vector.load %arg8[%c0_22, %c0_23] : memref<128x128xf32, #tpu.memory_space<vmem>>, vector<128x128xf32>
    tpu.vector_store %arg8[%c0_22, %c0_23], %29 {strides = array<i32>} : memref<128x128xf32, #tpu.memory_space<vmem>>, vector<128x128xf32>,
    return
  }
  func.func @transform_0(%arg0: i32) -> (i32, i32) {
    %c0_i32 = arith.constant 0 : i32
    %c0_i32_0 = arith.constant 0 : i32
    return %arg0, %c0_i32 : i32, i32
  }
  func.func @transform_1(%arg0: i32) -> (i32, i32) {
    %c0_i32 = arith.constant 0 : i32
    %c0_i32_0 = arith.constant 0 : i32
    %c0_i32_1 = arith.constant 0 : i32
    return %c0_i32, %c0_i32_0 : i32, i32
  }
  func.func @transform_2(%arg0: i32) -> (i32, i32) {
    %c0_i32 = arith.constant 0 : i32
    %c0_i32_0 = arith.constant 0 : i32
    %c0_i32_1 = arith.constant 0 : i32
    return %c0_i32, %c0_i32_0 : i32, i32
  }
  func.func @transform_3(%arg0: i32) -> (i32, i32, i32) {
    %c0_i32 = arith.constant 0 : i32
    %c0_i32_0 = arith.constant 0 : i32
    %c0_i32_1 = arith.constant 0 : i32
    %c0_i32_2 = arith.constant 0 : i32
    return %c0_i32, %c0_i32_0, %c0_i32_1 : i32, i32, i32
  }
  func.func @transform_4(%arg0: i32) -> (i32, i32, i32) {
    %c0_i32 = arith.constant 0 : i32
    %c0_i32_0 = arith.constant 0 : i32
    %c0_i32_1 = arith.constant 0 : i32
    %c0_i32_2 = arith.constant 0 : i32
    return %c0_i32, %c0_i32_0, %c0_i32_1 : i32, i32, i32
  }
  func.func @transform_5(%arg0: i32) -> (i32, i32) {
    %c0_i32 = arith.constant 0 : i32
    %c0_i32_0 = arith.constant 0 : i32
    %c0_i32_1 = arith.constant 0 : i32
    return %c0_i32, %c0_i32_0 : i32, i32
  }
  func.func @transform_6(%arg0: i32) -> (i32, i32) {
    %c0_i32 = arith.constant 0 : i32
    %c0_i32_0 = arith.constant 0 : i32
    %c0_i32_1 = arith.constant 0 : i32
    return %c0_i32, %c0_i32_0 : i32, i32
  }
  func.func @transform_7(%arg0: i32) -> (i32, i32) {
    %c0_i32 = arith.constant 0 : i32
    %c0_i32_0 = arith.constant 0 : i32
    return %arg0, %c0_i32 : i32, i32
  }
}

</mosaic_0001>

<llo_original>
// kernel: tpu_custom_call.1
$region0: #{tpu_custom_call.1}
  #allocation0 [shape = 'u32[]', space=smem, size = 0x4, offset = 0x4, fixed_abs, tag = 'smem constant byte address 0x4 - core index']
  #allocation1 [shape = 'u32[144,128]{1,0:T(1,128)}', space=vmem, size = 0x12000, scoped, tag = 'internal scratch']
  %s0 = inlined_call_operand.vmem [shape: f32[384,1], index: 0, kind: input, shape index: {}]
  %s1 = inlined_call_operand.vmem [shape: f32[1,128], index: 1, kind: input, shape index: {}]
  %s2 = inlined_call_operand.vmem [shape: f32[1,128], index: 2, kind: input, shape index: {}]
  %s3 = inlined_call_operand.vmem [shape: f32[2,128,128], index: 3, kind: input, shape index: {}]
  %s4 = inlined_call_operand.vmem [shape: f32[2,1,128], index: 4, kind: input, shape index: {}]
  %s5 = inlined_call_operand.vmem [shape: f32[128,128], index: 5, kind: input, shape index: {}]
  %s6 = inlined_call_operand.vmem [shape: f32[1,128], index: 6, kind: input, shape index: {}]
  %s7 = inlined_call_operand.hbm [shape: f32[384,128], index: 7, kind: output, shape index: {}]
  %s8 = sld [smem:[#allocation0]]
  $region61: #{tpu_custom_call.1} parent=0
    _
  %s10 = ssub.s32 1, %s8
  %s11 = scalar_select 0, %s10, %s8
  $region1: #{tpu_custom_call.1} parent=0
    #allocation2 [shape = 'u8[131072]{0}', space=vmem, size = 0x20000, scoped, tag = 'output window, operand 0']
    #allocation3 [shape = 's32[2]{0}', space=sflag, size = 0x8, scoped, tag = 'scoped memory for tpu_custom_call.1']
    %12 = vsyncpa [#allocation3], 0
    %s13 = scalar_lea.sflag [#allocation3], 1
    %14 = vsyncpa %s13, 0
    loop: start=0, step=1, limit=5
    $region2: #{tpu_custom_call.1} parent=1 // loop_pre_header
      _
    $region3: #{tpu_custom_call.1} parent=1 // loop_header
      %s16 = sphi 0, %s20
      %p17 = scmp.ge.s32.totalorder %s16, 5
      %s26 = sphi 0, %s28
      %s29 = sphi 0, %s26
      %s30 = sphi 0, %s29
      %s46 = sphi 0, %s30
      %s50 = sphi 0, %s50
      %s52 = sphi 0, %s50
      %s53 = sphi 0, %s52
      %s67 = sphi 0, %s53
      %s71 = sphi 0, %s71
      %s73 = sphi 0, %s71
      %s74 = sphi 0, %s73
      %s88 = sphi 0, %s74
      %s92 = sphi 0, %s92
      %s94 = sphi 0, %s92
      %s95 = sphi 0, %s94
      %s109 = sphi 0, %s95
      %s113 = sphi 0, %s113
      %s115 = sphi 0, %s113
      %s116 = sphi 0, %s115
      %s130 = sphi 0, %s116
      %s134 = sphi 0, %s134
      %s136 = sphi 0, %s134
      %s137 = sphi 0, %s136
      %s151 = sphi 0, %s137
      %s155 = sphi 0, %s155
      %s157 = sphi 0, %s155
      %s158 = sphi 0, %s157
      %s172 = sphi 0, %s158
      %s178 = sphi 0, %s180
      %s181 = sphi 0, %s178
      %s182 = sphi 0, %s181
      %s198 = sphi 0, %s182
    $region4: #{tpu_custom_call.1} parent=1 // loop_header_branch
      %19 = sbr.rel (%p17) target = $region8
    $region5: #{tpu_custom_call.1} parent=1 // loop_body
      %s21 = ssub.s32 %s16, 1
      %s22 = ssub.s32 %s16, 2
      %s23 = sadd.s32 %s16, 1
      %s24 = ssub.s32 %s16, %s23
      %p25 = scmp.eq.s32.totalorder %s24, 0
      %s27 = sadd.s32 %s26, 1
      %s28 = scalar_select %p25, %s26, %s27
      %p31 = pneg %p25
      %p32 = scmp.eq.s32.totalorder %s16, 2
      %p33 = por %p31, %p32
      %p34 = scmp.ne.s32.totalorder %s26, %s29
      %p35 = scmp.eq.s32.totalorder %s16, 0
      %p36 = por %p34, %p35
      %p37 = scmp.ne.s32.totalorder %s26, %s29
      %p38 = scmp.eq.s32.totalorder %s21, 2
      %p39 = por %p37, %p38
      %p40 = scmp.ne.s32.totalorder %s29, %s30
      %p41 = scmp.eq.s32.totalorder %s21, 0
      %p42 = por %p40, %p41
      %p43 = scmp.ne.s32.totalorder %s29, %s30
      %p44 = scmp.eq.s32.totalorder %s22, 2
      %p45 = por %p43, %p44
      %p47 = scmp.ne.s32.totalorder %s30, %s46
      %p48 = scmp.eq.s32.totalorder %s22, 0
      %p49 = por %p47, %p48
      %s51 = sadd.s32 %s50, 1
      %p54 = scmp.eq.s32.totalorder %s16, 2
      %p55 = scmp.ne.s32.totalorder %s50, %s52
      %p56 = scmp.eq.s32.totalorder %s16, 0
      %p57 = por %p55, %p56
      %p58 = scmp.ne.s32.totalorder %s50, %s52
      %p59 = scmp.eq.s32.totalorder %s21, 2
      %p60 = por %p58, %p59
      %p61 = scmp.ne.s32.totalorder %s52, %s53
      %p62 = scmp.eq.s32.totalorder %s21, 0
      %p63 = por %p61, %p62
      %p64 = scmp.ne.s32.totalorder %s52, %s53
      %p65 = scmp.eq.s32.totalorder %s22, 2
      %p66 = por %p64, %p65
      %p68 = scmp.ne.s32.totalorder %s53, %s67
      %p69 = scmp.eq.s32.totalorder %s22, 0
      %p70 = por %p68, %p69
      %s72 = sadd.s32 %s71, 1
      %p75 = scmp.eq.s32.totalorder %s16, 2
      %p76 = scmp.ne.s32.totalorder %s71, %s73
      %p77 = scmp.eq.s32.totalorder %s16, 0
      %p78 = por %p76, %p77
      %p79 = scmp.ne.s32.totalorder %s71, %s73
      %p80 = scmp.eq.s32.totalorder %s21, 2
      %p81 = por %p79, %p80
      %p82 = scmp.ne.s32.totalorder %s73, %s74
      %p83 = scmp.eq.s32.totalorder %s21, 0
      %p84 = por %p82, %p83
      %p85 = scmp.ne.s32.totalorder %s73, %s74
      %p86 = scmp.eq.s32.totalorder %s22, 2
      %p87 = por %p85, %p86
      %p89 = scmp.ne.s32.totalorder %s74, %s88
      %p90 = scmp.eq.s32.totalorder %s22, 0
      %p91 = por %p89, %p90
      %s93 = sadd.s32 %s92, 1
      %p96 = scmp.eq.s32.totalorder %s16, 2
      %p97 = scmp.ne.s32.totalorder %s92, %s94
      %p98 = scmp.eq.s32.totalorder %s16, 0
      %p99 = por %p97, %p98
      %p100 = scmp.ne.s32.totalorder %s92, %s94
      %p101 = scmp.eq.s32.totalorder %s21, 2
      %p102 = por %p100, %p101
      %p103 = scmp.ne.s32.totalorder %s94, %s95
      %p104 = scmp.eq.s32.totalorder %s21, 0
      %p105 = por %p103, %p104
      %p106 = scmp.ne.s32.totalorder %s94, %s95
      %p107 = scmp.eq.s32.totalorder %s22, 2
      %p108 = por %p106, %p107
      %p110 = scmp.ne.s32.totalorder %s95, %s109
      %p111 = scmp.eq.s32.totalorder %s22, 0
      %p112 = por %p110, %p111
      %s114 = sadd.s32 %s113, 1
      %p117 = scmp.eq.s32.totalorder %s16, 2
      %p118 = scmp.ne.s32.totalorder %s113, %s115
      %p119 = scmp.eq.s32.totalorder %s16, 0
      %p120 = por %p118, %p119
      %p121 = scmp.ne.s32.totalorder %s113, %s115
      %p122 = scmp.eq.s32.totalorder %s21, 2
      %p123 = por %p121, %p122
      %p124 = scmp.ne.s32.totalorder %s115, %s116
      %p125 = scmp.eq.s32.totalorder %s21, 0
      %p126 = por %p124, %p125
      %p127 = scmp.ne.s32.totalorder %s115, %s116
      %p128 = scmp.eq.s32.totalorder %s22, 2
      %p129 = por %p127, %p128
      %p131 = scmp.ne.s32.totalorder %s116, %s130
      %p132 = scmp.eq.s32.totalorder %s22, 0
      %p133 = por %p131, %p132
      %s135 = sadd.s32 %s134, 1
      %p138 = scmp.eq.s32.totalorder %s16, 2
      %p139 = scmp.ne.s32.totalorder %s134, %s136
      %p140 = scmp.eq.s32.totalorder %s16, 0
      %p141 = por %p139, %p140
      %p142 = scmp.ne.s32.totalorder %s134, %s136
      %p143 = scmp.eq.s32.totalorder %s21, 2
      %p144 = por %p142, %p143
      %p145 = scmp.ne.s32.totalorder %s136, %s137
      %p146 = scmp.eq.s32.totalorder %s21, 0
      %p147 = por %p145, %p146
      %p148 = scmp.ne.s32.totalorder %s136, %s137
      %p149 = scmp.eq.s32.totalorder %s22, 2
      %p150 = por %p148, %p149
      %p152 = scmp.ne.s32.totalorder %s137, %s151
      %p153 = scmp.eq.s32.totalorder %s22, 0
      %p154 = por %p152, %p153
      %s156 = sadd.s32 %s155, 1
      %p159 = scmp.eq.s32.totalorder %s16, 2
      %p160 = scmp.ne.s32.totalorder %s155, %s157
      %p161 = scmp.eq.s32.totalorder %s16, 0
      %p162 = por %p160, %p161
      %p163 = scmp.ne.s32.totalorder %s155, %s157
      %p164 = scmp.eq.s32.totalorder %s21, 2
      %p165 = por %p163, %p164
      %p166 = scmp.ne.s32.totalorder %s157, %s158
      %p167 = scmp.eq.s32.totalorder %s21, 0
      %p168 = por %p166, %p167
      %p169 = scmp.ne.s32.totalorder %s157, %s158
      %p170 = scmp.eq.s32.totalorder %s22, 2
      %p171 = por %p169, %p170
      %p173 = scmp.ne.s32.totalorder %s158, %s172
      %p174 = scmp.eq.s32.totalorder %s22, 0
      %p175 = por %p173, %p174
      %s176 = ssub.s32 %s16, %s23
      %p177 = scmp.eq.s32.totalorder %s176, 0
      %s179 = sadd.s32 %s178, 1
      %s180 = scalar_select %p177, %s178, %s179
      %p183 = pneg %p177
      %p184 = scmp.eq.s32.totalorder %s16, 2
      %p185 = por %p183, %p184
      %p186 = scmp.ne.s32.totalorder %s178, %s181
      %p187 = scmp.eq.s32.totalorder %s16, 0
      %p188 = por %p186, %p187
      %p189 = scmp.ne.s32.totalorder %s178, %s181
      %p190 = scmp.eq.s32.totalorder %s21, 2
      %p191 = por %p189, %p190
      %p192 = scmp.ne.s32.totalorder %s181, %s182
      %p193 = scmp.eq.s32.totalorder %s21, 0
      %p194 = por %p192, %p193
      %p195 = scmp.ne.s32.totalorder %s181, %s182
      %p196 = scmp.eq.s32.totalorder %s22, 2
      %p197 = por %p195, %p196
      %p199 = scmp.ne.s32.totalorder %s182, %s198
      %p200 = scmp.eq.s32.totalorder %s22, 0
      %p201 = por %p199, %p200
      %p202 = scmp.le.s32.totalorder 1, %s16
      %p203 = scmp.lt.s32.totalorder %s16, 4
      %p204 = pnand %p202, %p203
      %p205 = pneg %p204
      // Predicated region
      $region9: #{tpu_custom_call.1} parent=5 // pred_check
        _
      $region10: #{tpu_custom_call.1} parent=5 // pred_check_branch
        %207 = sbr.rel (%p204) target = $region12
      $region11: #{tpu_custom_call.1} parent=5 // pred_region
        %s208 = ssub.s32 %s16, 1
        // Predicated region
        $region13: #{tpu_custom_call.1} parent=11 // pred_check
          %p209 = pneg %p63
        $region14: #{tpu_custom_call.1} parent=11 // pred_check_branch
          %211 = sbr.rel (%p209) target = $region16
        $region15: #{tpu_custom_call.1} parent=11 // pred_region
          _
        $region16: #{tpu_custom_call.1} parent=11 // pred_fallthru
          _
        // Predicated region
        $region17: #{tpu_custom_call.1} parent=11 // pred_check
          %p212 = pneg %p84
        $region18: #{tpu_custom_call.1} parent=11 // pred_check_branch
          %214 = sbr.rel (%p212) target = $region20
        $region19: #{tpu_custom_call.1} parent=11 // pred_region
          _
        $region20: #{tpu_custom_call.1} parent=11 // pred_fallthru
          _
        // Predicated region
        $region21: #{tpu_custom_call.1} parent=11 // pred_check
          %p215 = pneg %p105
        $region22: #{tpu_custom_call.1} parent=11 // pred_check_branch
          %217 = sbr.rel (%p215) target = $region24
        $region23: #{tpu_custom_call.1} parent=11 // pred_region
          _
        $region24: #{tpu_custom_call.1} parent=11 // pred_fallthru
          _
        // Predicated region
        $region25: #{tpu_custom_call.1} parent=11 // pred_check
          %p218 = pneg %p126
        $region26: #{tpu_custom_call.1} parent=11 // pred_check_branch
          %220 = sbr.rel (%p218) target = $region28
        $region27: #{tpu_custom_call.1} parent=11 // pred_region
          _
        $region28: #{tpu_custom_call.1} parent=11 // pred_fallthru
          _
        // Predicated region
        $region29: #{tpu_custom_call.1} parent=11 // pred_check
          %p221 = pneg %p147
        $region30: #{tpu_custom_call.1} parent=11 // pred_check_branch
          %223 = sbr.rel (%p221) target = $region32
        $region31: #{tpu_custom_call.1} parent=11 // pred_region
          _
        $region32: #{tpu_custom_call.1} parent=11 // pred_fallthru
          _
        // Predicated region
        $region33: #{tpu_custom_call.1} parent=11 // pred_check
          %p224 = pneg %p168
        $region34: #{tpu_custom_call.1} parent=11 // pred_check_branch
          %226 = sbr.rel (%p224) target = $region36
        $region35: #{tpu_custom_call.1} parent=11 // pred_region
          _
        $region36: #{tpu_custom_call.1} parent=11 // pred_fallthru
          _
      $region12: #{tpu_custom_call.1} parent=5 // pred_fallthru
        _
      %p227 = scmp.lt.s32.totalorder %s16, 3
      // Predicated region
      $region37: #{tpu_custom_call.1} parent=5 // pred_check
        %p228 = pneg %p227
      $region38: #{tpu_custom_call.1} parent=5 // pred_check_branch
        %230 = sbr.rel (%p228) target = $region40
      $region39: #{tpu_custom_call.1} parent=5 // pred_region
        // Predicated region
        $region41: #{tpu_custom_call.1} parent=39 // pred_check
          %p231 = pneg %p36
        $region42: #{tpu_custom_call.1} parent=39 // pred_check_branch
          %233 = sbr.rel (%p231) target = $region44
        $region43: #{tpu_custom_call.1} parent=39 // pred_region
          %s234 = smul.u32 16, %s16
          %p235 = scmp.lt.s32.totalorder %s234, 47
          %s236 = scalar_select %p235, %s234, 47
          %s237 = smul.addr %s236, 8
          %s238 = scalar_lea.vmem %s0, %s237
          %s239 = smul.u32 16, %s16
        $region44: #{tpu_custom_call.1} parent=39 // pred_fallthru
          _
      $region40: #{tpu_custom_call.1} parent=5 // pred_fallthru
        _
      %p240 = scmp.le.s32.totalorder 1, %s16
      %p241 = scmp.lt.s32.totalorder %s16, 4
      %p242 = pnand %p240, %p241
      %p243 = pneg %p242
      // Predicated region
      $region45: #{tpu_custom_call.1} parent=5 // pred_check
        _
      $region46: #{tpu_custom_call.1} parent=5 // pred_check_branch
        %245 = sbr.rel (%p242) target = $region48
      $region47: #{tpu_custom_call.1} parent=5 // pred_region
        %s246 = ssub.s32 %s16, 1
        %s247 = smul.u32 16, %s21
        %p248 = scmp.lt.s32.totalorder %s247, 47
        %s249 = scalar_select %p248, %s247, 47
        %s250 = smul.addr %s249, 8
        %s251 = scalar_lea.vmem %s0, %s250
        %p252 = pneg %p42
        %p253 = pneg %p39
        %p254 = pneg %p63
        %p255 = pneg %p60
        %p256 = pneg %p84
        %p257 = pneg %p81
        %p258 = pneg %p105
        %p259 = pneg %p102
        %p260 = pneg %p126
        %p261 = pneg %p123
        %p262 = pneg %p147
        %p263 = pneg %p144
        %p264 = pneg %p168
        %p265 = pneg %p165
        %p266 = pneg %p194
        %p267 = pneg %p191
        %s268 = sand.u32 %s181, 1
        %s269 = scalar_lea.sflag [#allocation3], %s268
        %s270 = sand.u32 %s181, 1
        %s271 = smul.addr %s270, 128
        %s272 = scalar_lea.vmem [#allocation2], %s271
        %s273 = smul.u32 16, %s21
        %p274 = scmp.lt.s32.totalorder %s273, 47
        %s275 = scalar_select %p274, %s273, 47
        %s276 = smul.addr %s275, 8
        %s277 = scalar_lea.vmem %s0, %s276
        %s278 = smul.u32 16, %s21
        %s279 = smul.u32 16, %s21
        %v280 = vld [vmem:[%s277] sm:$0xff]
        %v281 = vld [vmem:[%s277 + $0x8] sm:$0xff]
        %v282 = vld [vmem:[%s277 + $0x10] sm:$0xff]
        %v283 = vld [vmem:[%s277 + $0x18] sm:$0xff]
        %v284 = vld [vmem:[%s277 + $0x20] sm:$0xff]
        %v285 = vld [vmem:[%s277 + $0x28] sm:$0xff]
        %v286 = vld [vmem:[%s277 + $0x30] sm:$0xff]
        %v287 = vld [vmem:[%s277 + $0x38] sm:$0xff]
        %v288 = vld [vmem:[%s277 + $0x40] sm:$0xff]
        %v289 = vld [vmem:[%s277 + $0x48] sm:$0xff]
        %v290 = vld [vmem:[%s277 + $0x50] sm:$0xff]
        %v291 = vld [vmem:[%s277 + $0x58] sm:$0xff]
        %v292 = vld [vmem:[%s277 + $0x60] sm:$0xff]
        %v293 = vld [vmem:[%s277 + $0x68] sm:$0xff]
        %v294 = vld [vmem:[%s277 + $0x70] sm:$0xff]
        %v295 = vld [vmem:[%s277 + $0x78] sm:$0xff]
        %v296 = vld [vmem:[%s1] sm:$0x1]
        %298 = vset.pattern.permute.xlu0 0
        %299 = vperm.xlu0 %298, %v280
        %v300 = vpop.permute.xlu0 %299
        %303 = vset.pattern.permute.xlu0 0
        %304 = vperm.xlu0 %303, %v281
        %v305 = vpop.permute.xlu0 %304
        %308 = vset.pattern.permute.xlu0 0
        %309 = vperm.xlu0 %308, %v282
        %v310 = vpop.permute.xlu0 %309
        %313 = vset.pattern.permute.xlu0 0
        %314 = vperm.xlu0 %313, %v283
        %v315 = vpop.permute.xlu0 %314
        %318 = vset.pattern.permute.xlu0 0
        %319 = vperm.xlu0 %318, %v284
        %v320 = vpop.permute.xlu0 %319
        %323 = vset.pattern.permute.xlu0 0
        %324 = vperm.xlu0 %323, %v285
        %v325 = vpop.permute.xlu0 %324
        %328 = vset.pattern.permute.xlu0 0
        %329 = vperm.xlu0 %328, %v286
        %v330 = vpop.permute.xlu0 %329
        %333 = vset.pattern.permute.xlu0 0
        %334 = vperm.xlu0 %333, %v287
        %v335 = vpop.permute.xlu0 %334
        %338 = vset.pattern.permute.xlu0 0
        %339 = vperm.xlu0 %338, %v288
        %v340 = vpop.permute.xlu0 %339
        %343 = vset.pattern.permute.xlu0 0
        %344 = vperm.xlu0 %343, %v289
        %v345 = vpop.permute.xlu0 %344
        %348 = vset.pattern.permute.xlu0 0
        %349 = vperm.xlu0 %348, %v290
        %v350 = vpop.permute.xlu0 %349
        %353 = vset.pattern.permute.xlu0 0
        %354 = vperm.xlu0 %353, %v291
        %v355 = vpop.permute.xlu0 %354
        %358 = vset.pattern.permute.xlu0 0
        %359 = vperm.xlu0 %358, %v292
        %v360 = vpop.permute.xlu0 %359
        %363 = vset.pattern.permute.xlu0 0
        %364 = vperm.xlu0 %363, %v293
        %v365 = vpop.permute.xlu0 %364
        %368 = vset.pattern.permute.xlu0 0
        %369 = vperm.xlu0 %368, %v294
        %v370 = vpop.permute.xlu0 %369
        %373 = vset.pattern.permute.xlu0 0
        %374 = vperm.xlu0 %373, %v295
        %v375 = vpop.permute.xlu0 %374
        %v378 = vlaneseq
        %v379 = vshrl.u32 %v378, 7
        %v380 = vsub.s32 0, %v379
        %v381 = vrot.slane %v296, %v380
        %v383 = vmul.f32 %v300, %v381
        %v384 = vmul.f32 %v305, %v381
        %v385 = vmul.f32 %v310, %v381
        %v386 = vmul.f32 %v315, %v381
        %v387 = vmul.f32 %v320, %v381
        %v388 = vmul.f32 %v325, %v381
        %v389 = vmul.f32 %v330, %v381
        %v390 = vmul.f32 %v335, %v381
        %v391 = vmul.f32 %v340, %v381
        %v392 = vmul.f32 %v345, %v381
        %v393 = vmul.f32 %v350, %v381
        %v394 = vmul.f32 %v355, %v381
        %v395 = vmul.f32 %v360, %v381
        %v396 = vmul.f32 %v365, %v381
        %v397 = vmul.f32 %v370, %v381
        %v398 = vmul.f32 %v375, %v381
        %v399 = vld [vmem:[%s2] sm:$0x1]
        %v401 = vlaneseq
        %v402 = vshrl.u32 %v401, 7
        %v403 = vsub.s32 0, %v402
        %v404 = vrot.slane %v399, %v403
        %v406 = vadd.f32 %v383, %v404
        %v407 = vadd.f32 %v384, %v404
        %v408 = vadd.f32 %v385, %v404
        %v409 = vadd.f32 %v386, %v404
        %v410 = vadd.f32 %v387, %v404
        %v411 = vadd.f32 %v388, %v404
        %v412 = vadd.f32 %v389, %v404
        %v413 = vadd.f32 %v390, %v404
        %v414 = vadd.f32 %v391, %v404
        %v415 = vadd.f32 %v392, %v404
        %v416 = vadd.f32 %v393, %v404
        %v417 = vadd.f32 %v394, %v404
        %v418 = vadd.f32 %v395, %v404
        %v419 = vadd.f32 %v396, %v404
        %v420 = vadd.f32 %v397, %v404
        %v421 = vadd.f32 %v398, %v404
        %v422 = vtanh.pop %v406
        %v423 = vtanh.pop %v407
        %v424 = vtanh.pop %v408
        %v425 = vtanh.pop %v409
        %v426 = vtanh.pop %v410
        %v427 = vtanh.pop %v411
        %v428 = vtanh.pop %v412
        %v429 = vtanh.pop %v413
        %v430 = vtanh.pop %v414
        %v431 = vtanh.pop %v415
        %v432 = vtanh.pop %v416
        %v433 = vtanh.pop %v417
        %v434 = vtanh.pop %v418
        %v435 = vtanh.pop %v419
        %v436 = vtanh.pop %v420
        %v437 = vtanh.pop %v421
        %v438 = vld [vmem:[%s3] sm:$0xff]
        %v439 = vld [vmem:[%s3 + $0x8] sm:$0xff]
        %v440 = vld [vmem:[%s3 + $0x10] sm:$0xff]
        %v441 = vld [vmem:[%s3 + $0x18] sm:$0xff]
        %v442 = vld [vmem:[%s3 + $0x20] sm:$0xff]
        %v443 = vld [vmem:[%s3 + $0x28] sm:$0xff]
        %v444 = vld [vmem:[%s3 + $0x30] sm:$0xff]
        %v445 = vld [vmem:[%s3 + $0x38] sm:$0xff]
        %v446 = vld [vmem:[%s3 + $0x40] sm:$0xff]
        %v447 = vld [vmem:[%s3 + $0x48] sm:$0xff]
        %v448 = vld [vmem:[%s3 + $0x50] sm:$0xff]
        %v449 = vld [vmem:[%s3 + $0x58] sm:$0xff]
        %v450 = vld [vmem:[%s3 + $0x60] sm:$0xff]
        %v451 = vld [vmem:[%s3 + $0x68] sm:$0xff]
        %v452 = vld [vmem:[%s3 + $0x70] sm:$0xff]
        %v453 = vld [vmem:[%s3 + $0x78] sm:$0xff]
        %v454 = vld [vmem:[%s4] sm:$0x1]
        %v456 = vlaneseq
        %v457 = vshrl.u32 %v456, 7
        %v458 = vsub.s32 0, %v457
        %v459 = vrot.slane %v454, %v458
        %461 = vmatprep.subr.mxu0 0.0
        %462 = vmatpush1.msra.mxu0 %v453
        %463 = vmatprep.subr.mxu0 0.0
        %464 = vmatpush1.msra.mxu0 %v452
        %465 = vmatprep.subr.mxu0 0.0
        %466 = vmatpush1.msra.mxu0 %v451
        %467 = vmatprep.subr.mxu0 0.0
        %468 = vmatpush1.msra.mxu0 %v450
        %469 = vmatprep.subr.mxu0 0.0
        %470 = vmatpush1.msra.mxu0 %v449
        %471 = vmatprep.subr.mxu0 0.0
        %472 = vmatpush1.msra.mxu0 %v448
        %473 = vmatprep.subr.mxu0 0.0
        %474 = vmatpush1.msra.mxu0 %v447
        %475 = vmatprep.subr.mxu0 0.0
        %476 = vmatpush1.msra.mxu0 %v446
        %477 = vmatprep.subr.mxu0 0.0
        %478 = vmatpush1.msra.mxu0 %v445
        %479 = vmatprep.subr.mxu0 0.0
        %480 = vmatpush1.msra.mxu0 %v444
        %481 = vmatprep.subr.mxu0 0.0
        %482 = vmatpush1.msra.mxu0 %v443
        %483 = vmatprep.subr.mxu0 0.0
        %484 = vmatpush1.msra.mxu0 %v442
        %485 = vmatprep.subr.mxu0 0.0
        %486 = vmatpush1.msra.mxu0 %v441
        %487 = vmatprep.subr.mxu0 0.0
        %488 = vmatpush1.msra.mxu0 %v440
        %489 = vmatprep.subr.mxu0 0.0
        %490 = vmatpush1.msra.mxu0 %v439
        %491 = vmatprep.subr.mxu0 0.0
        %492 = vmatpush1.msra.mxu0 %v438
        %493 = vmatprep.subr.mxu0 0.0
        %494 = vmatpush2.msra.mxu0 0.0
        %495 = vmatprep.subr.mxu0 0.0
        %496 = vmatpush2.msra.mxu0 0.0
        %497 = vmatprep.subr.mxu0 0.0
        %498 = vmatpush2.msra.mxu0 0.0
        %499 = vmatprep.subr.mxu0 0.0
        %500 = vmatpush2.msra.mxu0 0.0
        %501 = vmatprep.subr.mxu0 0.0
        %502 = vmatpush2.msra.mxu0 0.0
        %503 = vmatprep.subr.mxu0 0.0
        %504 = vmatpush2.msra.mxu0 0.0
        %505 = vmatprep.subr.mxu0 0.0
        %506 = vmatpush2.msra.mxu0 0.0
        %507 = vmatprep.subr.mxu0 0.0
        %508 = vmatpush2.msra.mxu0 0.0
        %509 = vmatprep.subr.mxu0 0.0
        %510 = vmatpush2.msra.mxu0 0.0
        %511 = vmatprep.subr.mxu0 0.0
        %512 = vmatpush2.msra.mxu0 0.0
        %513 = vmatprep.subr.mxu0 0.0
        %514 = vmatpush2.msra.mxu0 0.0
        %515 = vmatprep.subr.mxu0 0.0
        %516 = vmatpush2.msra.mxu0 0.0
        %517 = vmatprep.subr.mxu0 0.0
        %518 = vmatpush2.msra.mxu0 0.0
        %519 = vmatprep.subr.mxu0 0.0
        %520 = vmatpush2.msra.mxu0 0.0
        %521 = vmatprep.subr.mxu0 0.0
        %522 = vmatpush2.msra.mxu0 0.0
        %523 = vmatprep.subr.mxu0 0.0
        %524 = vmatpush2.msra.mxu0 0.0
        %525 = vmatprep.mubr.f32.mxu0 0.0
        %526 = vmatmul.mubr.f32.gmra.mxu0 %v422
        %v527 = vpop.f32.mrf.mxu0
        %v528 = vadd.f32 %v459, %v527
        %v529 = vpop.f32.mrf.mxu0
        %530 = vmatprep.mubr.f32.mxu0 0.0
        %531 = vmatmul.mubr.f32.gmra.mxu0 %v423
        %v532 = vpop.f32.mrf.mxu0
        %v533 = vadd.f32 %v459, %v532
        %v534 = vpop.f32.mrf.mxu0
        %535 = vmatprep.mubr.f32.mxu0 0.0
        %536 = vmatmul.mubr.f32.gmra.mxu0 %v424
        %v537 = vpop.f32.mrf.mxu0
        %v538 = vadd.f32 %v459, %v537
        %v539 = vpop.f32.mrf.mxu0
        %540 = vmatprep.mubr.f32.mxu0 0.0
        %541 = vmatmul.mubr.f32.gmra.mxu0 %v425
        %v542 = vpop.f32.mrf.mxu0
        %v543 = vadd.f32 %v459, %v542
        %v544 = vpop.f32.mrf.mxu0
        %545 = vmatprep.mubr.f32.mxu0 0.0
        %546 = vmatmul.mubr.f32.gmra.mxu0 %v426
        %v547 = vpop.f32.mrf.mxu0
        %v548 = vadd.f32 %v459, %v547
        %v549 = vpop.f32.mrf.mxu0
        %550 = vmatprep.mubr.f32.mxu0 0.0
        %551 = vmatmul.mubr.f32.gmra.mxu0 %v427
        %v552 = vpop.f32.mrf.mxu0
        %v553 = vadd.f32 %v459, %v552
        %v554 = vpop.f32.mrf.mxu0
        %555 = vmatprep.mubr.f32.mxu0 0.0
        %556 = vmatmul.mubr.f32.gmra.mxu0 %v428
        %v557 = vpop.f32.mrf.mxu0
        %v558 = vadd.f32 %v459, %v557
        %v559 = vpop.f32.mrf.mxu0
        %560 = vmatprep.mubr.f32.mxu0 0.0
        %561 = vmatmul.mubr.f32.gmra.mxu0 %v429
        %v562 = vpop.f32.mrf.mxu0
        %v563 = vadd.f32 %v459, %v562
        %v564 = vpop.f32.mrf.mxu0
        %565 = vmatprep.mubr.f32.mxu0 0.0
        %566 = vmatmul.mubr.f32.gmra.mxu0 %v430
        %v567 = vpop.f32.mrf.mxu0
        %v568 = vadd.f32 %v459, %v567
        %v569 = vpop.f32.mrf.mxu0
        %570 = vmatprep.mubr.f32.mxu0 0.0
        %571 = vmatmul.mubr.f32.gmra.mxu0 %v431
        %v572 = vpop.f32.mrf.mxu0
        %v573 = vadd.f32 %v459, %v572
        %v574 = vpop.f32.mrf.mxu0
        %575 = vmatprep.mubr.f32.mxu0 0.0
        %576 = vmatmul.mubr.f32.gmra.mxu0 %v432
        %v577 = vpop.f32.mrf.mxu0
        %v578 = vadd.f32 %v459, %v577
        %v579 = vpop.f32.mrf.mxu0
        %580 = vmatprep.mubr.f32.mxu0 0.0
        %581 = vmatmul.mubr.f32.gmra.mxu0 %v433
        %v582 = vpop.f32.mrf.mxu0
        %v583 = vadd.f32 %v459, %v582
        %v584 = vpop.f32.mrf.mxu0
        %585 = vmatprep.mubr.f32.mxu0 0.0
        %586 = vmatmul.mubr.f32.gmra.mxu0 %v434
        %v587 = vpop.f32.mrf.mxu0
        %v588 = vadd.f32 %v459, %v587
        %v589 = vpop.f32.mrf.mxu0
        %590 = vmatprep.mubr.f32.mxu0 0.0
        %591 = vmatmul.mubr.f32.gmra.mxu0 %v435
        %v592 = vpop.f32.mrf.mxu0
        %v593 = vadd.f32 %v459, %v592
        %v594 = vpop.f32.mrf.mxu0
        %595 = vmatprep.mubr.f32.mxu0 0.0
        %596 = vmatmul.mubr.f32.gmra.mxu0 %v436
        %v597 = vpop.f32.mrf.mxu0
        %v598 = vadd.f32 %v459, %v597
        %v599 = vpop.f32.mrf.mxu0
        %600 = vmatprep.mubr.f32.mxu0 0.0
        %601 = vmatmul.mubr.f32.gmra.mxu0 %v437
        %v602 = vpop.f32.mrf.mxu0
        %v603 = vadd.f32 %v459, %v602
        %v604 = vpop.f32.mrf.mxu0
        %605 = vdwg.mxu0
        %v606 = vtanh.pop %v528
        %v607 = vtanh.pop %v533
        %v608 = vtanh.pop %v538
        %v609 = vtanh.pop %v543
        %v610 = vtanh.pop %v548
        %v611 = vtanh.pop %v553
        %v612 = vtanh.pop %v558
        %v613 = vtanh.pop %v563
        %v614 = vtanh.pop %v568
        %v615 = vtanh.pop %v573
        %v616 = vtanh.pop %v578
        %v617 = vtanh.pop %v583
        %v618 = vtanh.pop %v588
        %v619 = vtanh.pop %v593
        %v620 = vtanh.pop %v598
        %v621 = vtanh.pop %v603
        %s622 = scalar_lea.vmem %s3, 128
        %v623 = vld [vmem:[%s622] sm:$0xff]
        %v624 = vld [vmem:[%s622 + $0x8] sm:$0xff]
        %v625 = vld [vmem:[%s622 + $0x10] sm:$0xff]
        %v626 = vld [vmem:[%s622 + $0x18] sm:$0xff]
        %v627 = vld [vmem:[%s622 + $0x20] sm:$0xff]
        %v628 = vld [vmem:[%s622 + $0x28] sm:$0xff]
        %v629 = vld [vmem:[%s622 + $0x30] sm:$0xff]
        %v630 = vld [vmem:[%s622 + $0x38] sm:$0xff]
        %v631 = vld [vmem:[%s622 + $0x40] sm:$0xff]
        %v632 = vld [vmem:[%s622 + $0x48] sm:$0xff]
        %v633 = vld [vmem:[%s622 + $0x50] sm:$0xff]
        %v634 = vld [vmem:[%s622 + $0x58] sm:$0xff]
        %v635 = vld [vmem:[%s622 + $0x60] sm:$0xff]
        %v636 = vld [vmem:[%s622 + $0x68] sm:$0xff]
        %v637 = vld [vmem:[%s622 + $0x70] sm:$0xff]
        %v638 = vld [vmem:[%s622 + $0x78] sm:$0xff]
        %s639 = scalar_lea.vmem %s4, 1
        %v640 = vld [vmem:[%s639] sm:$0x1]
        %v642 = vlaneseq
        %v643 = vshrl.u32 %v642, 7
        %v644 = vsub.s32 0, %v643
        %v645 = vrot.slane %v640, %v644
        %647 = vmatprep.subr.mxu0 0.0
        %648 = vmatpush1.msra.mxu0 %v638
        %649 = vmatprep.subr.mxu0 0.0
        %650 = vmatpush1.msra.mxu0 %v637
        %651 = vmatprep.subr.mxu0 0.0
        %652 = vmatpush1.msra.mxu0 %v636
        %653 = vmatprep.subr.mxu0 0.0
        %654 = vmatpush1.msra.mxu0 %v635
        %655 = vmatprep.subr.mxu0 0.0
        %656 = vmatpush1.msra.mxu0 %v634
        %657 = vmatprep.subr.mxu0 0.0
        %658 = vmatpush1.msra.mxu0 %v633
        %659 = vmatprep.subr.mxu0 0.0
        %660 = vmatpush1.msra.mxu0 %v632
        %661 = vmatprep.subr.mxu0 0.0
        %662 = vmatpush1.msra.mxu0 %v631
        %663 = vmatprep.subr.mxu0 0.0
        %664 = vmatpush1.msra.mxu0 %v630
        %665 = vmatprep.subr.mxu0 0.0
        %666 = vmatpush1.msra.mxu0 %v629
        %667 = vmatprep.subr.mxu0 0.0
        %668 = vmatpush1.msra.mxu0 %v628
        %669 = vmatprep.subr.mxu0 0.0
        %670 = vmatpush1.msra.mxu0 %v627
        %671 = vmatprep.subr.mxu0 0.0
        %672 = vmatpush1.msra.mxu0 %v626
        %673 = vmatprep.subr.mxu0 0.0
        %674 = vmatpush1.msra.mxu0 %v625
        %675 = vmatprep.subr.mxu0 0.0
        %676 = vmatpush1.msra.mxu0 %v624
        %677 = vmatprep.subr.mxu0 0.0
        %678 = vmatpush1.msra.mxu0 %v623
        %679 = vmatprep.subr.mxu0 0.0
        %680 = vmatpush2.msra.mxu0 0.0
        %681 = vmatprep.subr.mxu0 0.0
        %682 = vmatpush2.msra.mxu0 0.0
        %683 = vmatprep.subr.mxu0 0.0
        %684 = vmatpush2.msra.mxu0 0.0
        %685 = vmatprep.subr.mxu0 0.0
        %686 = vmatpush2.msra.mxu0 0.0
        %687 = vmatprep.subr.mxu0 0.0
        %688 = vmatpush2.msra.mxu0 0.0
        %689 = vmatprep.subr.mxu0 0.0
        %690 = vmatpush2.msra.mxu0 0.0
        %691 = vmatprep.subr.mxu0 0.0
        %692 = vmatpush2.msra.mxu0 0.0
        %693 = vmatprep.subr.mxu0 0.0
        %694 = vmatpush2.msra.mxu0 0.0
        %695 = vmatprep.subr.mxu0 0.0
        %696 = vmatpush2.msra.mxu0 0.0
        %697 = vmatprep.subr.mxu0 0.0
        %698 = vmatpush2.msra.mxu0 0.0
        %699 = vmatprep.subr.mxu0 0.0
        %700 = vmatpush2.msra.mxu0 0.0
        %701 = vmatprep.subr.mxu0 0.0
        %702 = vmatpush2.msra.mxu0 0.0
        %703 = vmatprep.subr.mxu0 0.0
        %704 = vmatpush2.msra.mxu0 0.0
        %705 = vmatprep.subr.mxu0 0.0
        %706 = vmatpush2.msra.mxu0 0.0
        %707 = vmatprep.subr.mxu0 0.0
        %708 = vmatpush2.msra.mxu0 0.0
        %709 = vmatprep.subr.mxu0 0.0
        %710 = vmatpush2.msra.mxu0 0.0
        %711 = vmatprep.mubr.f32.mxu0 0.0
        %712 = vmatmul.mubr.f32.gmra.mxu0 %v606
        %v713 = vpop.f32.mrf.mxu0
        %v714 = vadd.f32 %v645, %v713
        %v715 = vpop.f32.mrf.mxu0
        %716 = vmatprep.mubr.f32.mxu0 0.0
        %717 = vmatmul.mubr.f32.gmra.mxu0 %v607
        %v718 = vpop.f32.mrf.mxu0
        %v719 = vadd.f32 %v645, %v718
        %v720 = vpop.f32.mrf.mxu0
        %721 = vmatprep.mubr.f32.mxu0 0.0
        %722 = vmatmul.mubr.f32.gmra.mxu0 %v608
        %v723 = vpop.f32.mrf.mxu0
        %v724 = vadd.f32 %v645, %v723
        %v725 = vpop.f32.mrf.mxu0
        %726 = vmatprep.mubr.f32.mxu0 0.0
        %727 = vmatmul.mubr.f32.gmra.mxu0 %v609
        %v728 = vpop.f32.mrf.mxu0
        %v729 = vadd.f32 %v645, %v728
        %v730 = vpop.f32.mrf.mxu0
        %731 = vmatprep.mubr.f32.mxu0 0.0
        %732 = vmatmul.mubr.f32.gmra.mxu0 %v610
        %v733 = vpop.f32.mrf.mxu0
        %v734 = vadd.f32 %v645, %v733
        %v735 = vpop.f32.mrf.mxu0
        %736 = vmatprep.mubr.f32.mxu0 0.0
        %737 = vmatmul.mubr.f32.gmra.mxu0 %v611
        %v738 = vpop.f32.mrf.mxu0
        %v739 = vadd.f32 %v645, %v738
        %v740 = vpop.f32.mrf.mxu0
        %741 = vmatprep.mubr.f32.mxu0 0.0
        %742 = vmatmul.mubr.f32.gmra.mxu0 %v612
        %v743 = vpop.f32.mrf.mxu0
        %v744 = vadd.f32 %v645, %v743
        %v745 = vpop.f32.mrf.mxu0
        %746 = vmatprep.mubr.f32.mxu0 0.0
        %747 = vmatmul.mubr.f32.gmra.mxu0 %v613
        %v748 = vpop.f32.mrf.mxu0
        %v749 = vadd.f32 %v645, %v748
        %v750 = vpop.f32.mrf.mxu0
        %751 = vmatprep.mubr.f32.mxu0 0.0
        %752 = vmatmul.mubr.f32.gmra.mxu0 %v614
        %v753 = vpop.f32.mrf.mxu0
        %v754 = vadd.f32 %v645, %v753
        %v755 = vpop.f32.mrf.mxu0
        %756 = vmatprep.mubr.f32.mxu0 0.0
        %757 = vmatmul.mubr.f32.gmra.mxu0 %v615
        %v758 = vpop.f32.mrf.mxu0
        %v759 = vadd.f32 %v645, %v758
        %v760 = vpop.f32.mrf.mxu0
        %761 = vmatprep.mubr.f32.mxu0 0.0
        %762 = vmatmul.mubr.f32.gmra.mxu0 %v616
        %v763 = vpop.f32.mrf.mxu0
        %v764 = vadd.f32 %v645, %v763
        %v765 = vpop.f32.mrf.mxu0
        %766 = vmatprep.mubr.f32.mxu0 0.0
        %767 = vmatmul.mubr.f32.gmra.mxu0 %v617
        %v768 = vpop.f32.mrf.mxu0
        %v769 = vadd.f32 %v645, %v768
        %v770 = vpop.f32.mrf.mxu0
        %771 = vmatprep.mubr.f32.mxu0 0.0
        %772 = vmatmul.mubr.f32.gmra.mxu0 %v618
        %v773 = vpop.f32.mrf.mxu0
        %v774 = vadd.f32 %v645, %v773
        %v775 = vpop.f32.mrf.mxu0
        %776 = vmatprep.mubr.f32.mxu0 0.0
        %777 = vmatmul.mubr.f32.gmra.mxu0 %v619
        %v778 = vpop.f32.mrf.mxu0
        %v779 = vadd.f32 %v645, %v778
        %v780 = vpop.f32.mrf.mxu0
        %781 = vmatprep.mubr.f32.mxu0 0.0
        %782 = vmatmul.mubr.f32.gmra.mxu0 %v620
        %v783 = vpop.f32.mrf.mxu0
        %v784 = vadd.f32 %v645, %v783
        %v785 = vpop.f32.mrf.mxu0
        %786 = vmatprep.mubr.f32.mxu0 0.0
        %787 = vmatmul.mubr.f32.gmra.mxu0 %v621
        %v788 = vpop.f32.mrf.mxu0
        %v789 = vadd.f32 %v645, %v788
        %v790 = vpop.f32.mrf.mxu0
        %791 = vdwg.mxu0
        %v792 = vtanh.pop %v714
        %v793 = vtanh.pop %v719
        %v794 = vtanh.pop %v724
        %v795 = vtanh.pop %v729
        %v796 = vtanh.pop %v734
        %v797 = vtanh.pop %v739
        %v798 = vtanh.pop %v744
        %v799 = vtanh.pop %v749
        %v800 = vtanh.pop %v754
        %v801 = vtanh.pop %v759
        %v802 = vtanh.pop %v764
        %v803 = vtanh.pop %v769
        %v804 = vtanh.pop %v774
        %v805 = vtanh.pop %v779
        %v806 = vtanh.pop %v784
        %v807 = vtanh.pop %v789
        %v808 = vld [vmem:[%s5] sm:$0xff]
        %v809 = vld [vmem:[%s5 + $0x8] sm:$0xff]
        %v810 = vld [vmem:[%s5 + $0x10] sm:$0xff]
        %v811 = vld [vmem:[%s5 + $0x18] sm:$0xff]
        %v812 = vld [vmem:[%s5 + $0x20] sm:$0xff]
        %v813 = vld [vmem:[%s5 + $0x28] sm:$0xff]
        %v814 = vld [vmem:[%s5 + $0x30] sm:$0xff]
        %v815 = vld [vmem:[%s5 + $0x38] sm:$0xff]
        %v816 = vld [vmem:[%s5 + $0x40] sm:$0xff]
        %v817 = vld [vmem:[%s5 + $0x48] sm:$0xff]
        %v818 = vld [vmem:[%s5 + $0x50] sm:$0xff]
        %v819 = vld [vmem:[%s5 + $0x58] sm:$0xff]
        %v820 = vld [vmem:[%s5 + $0x60] sm:$0xff]
        %v821 = vld [vmem:[%s5 + $0x68] sm:$0xff]
        %v822 = vld [vmem:[%s5 + $0x70] sm:$0xff]
        %v823 = vld [vmem:[%s5 + $0x78] sm:$0xff]
        %v824 = vld [vmem:[%s6] sm:$0x1]
        %v826 = vlaneseq
        %v827 = vshrl.u32 %v826, 7
        %v828 = vsub.s32 0, %v827
        %v829 = vrot.slane %v824, %v828
        %831 = vmatprep.subr.mxu0 0.0
        %832 = vmatpush1.msra.mxu0 %v823
        %833 = vmatprep.subr.mxu0 0.0
        %834 = vmatpush1.msra.mxu0 %v822
        %835 = vmatprep.subr.mxu0 0.0
        %836 = vmatpush1.msra.mxu0 %v821
        %837 = vmatprep.subr.mxu0 0.0
        %838 = vmatpush1.msra.mxu0 %v820
        %839 = vmatprep.subr.mxu0 0.0
        %840 = vmatpush1.msra.mxu0 %v819
        %841 = vmatprep.subr.mxu0 0.0
        %842 = vmatpush1.msra.mxu0 %v818
        %843 = vmatprep.subr.mxu0 0.0
        %844 = vmatpush1.msra.mxu0 %v817
        %845 = vmatprep.subr.mxu0 0.0
        %846 = vmatpush1.msra.mxu0 %v816
        %847 = vmatprep.subr.mxu0 0.0
        %848 = vmatpush1.msra.mxu0 %v815
        %849 = vmatprep.subr.mxu0 0.0
        %850 = vmatpush1.msra.mxu0 %v814
        %851 = vmatprep.subr.mxu0 0.0
        %852 = vmatpush1.msra.mxu0 %v813
        %853 = vmatprep.subr.mxu0 0.0
        %854 = vmatpush1.msra.mxu0 %v812
        %855 = vmatprep.subr.mxu0 0.0
        %856 = vmatpush1.msra.mxu0 %v811
        %857 = vmatprep.subr.mxu0 0.0
        %858 = vmatpush1.msra.mxu0 %v810
        %859 = vmatprep.subr.mxu0 0.0
        %860 = vmatpush1.msra.mxu0 %v809
        %861 = vmatprep.subr.mxu0 0.0
        %862 = vmatpush1.msra.mxu0 %v808
        %863 = vmatprep.subr.mxu0 0.0
        %864 = vmatpush2.msra.mxu0 0.0
        %865 = vmatprep.subr.mxu0 0.0
        %866 = vmatpush2.msra.mxu0 0.0
        %867 = vmatprep.subr.mxu0 0.0
        %868 = vmatpush2.msra.mxu0 0.0
        %869 = vmatprep.subr.mxu0 0.0
        %870 = vmatpush2.msra.mxu0 0.0
        %871 = vmatprep.subr.mxu0 0.0
        %872 = vmatpush2.msra.mxu0 0.0
        %873 = vmatprep.subr.mxu0 0.0
        %874 = vmatpush2.msra.mxu0 0.0
        %875 = vmatprep.subr.mxu0 0.0
        %876 = vmatpush2.msra.mxu0 0.0
        %877 = vmatprep.subr.mxu0 0.0
        %878 = vmatpush2.msra.mxu0 0.0
        %879 = vmatprep.subr.mxu0 0.0
        %880 = vmatpush2.msra.mxu0 0.0
        %881 = vmatprep.subr.mxu0 0.0
        %882 = vmatpush2.msra.mxu0 0.0
        %883 = vmatprep.subr.mxu0 0.0
        %884 = vmatpush2.msra.mxu0 0.0
        %885 = vmatprep.subr.mxu0 0.0
        %886 = vmatpush2.msra.mxu0 0.0
        %887 = vmatprep.subr.mxu0 0.0
        %888 = vmatpush2.msra.mxu0 0.0
        %889 = vmatprep.subr.mxu0 0.0
        %890 = vmatpush2.msra.mxu0 0.0
        %891 = vmatprep.subr.mxu0 0.0
        %892 = vmatpush2.msra.mxu0 0.0
        %893 = vmatprep.subr.mxu0 0.0
        %894 = vmatpush2.msra.mxu0 0.0
        %895 = vmatprep.mubr.f32.mxu0 0.0
        %896 = vmatmul.mubr.f32.gmra.mxu0 %v792
        %v897 = vpop.f32.mrf.mxu0
        %v898 = vadd.f32 %v829, %v897
        %v899 = vpop.f32.mrf.mxu0
        %900 = vmatprep.mubr.f32.mxu0 0.0
        %901 = vmatmul.mubr.f32.gmra.mxu0 %v793
        %v902 = vpop.f32.mrf.mxu0
        %v903 = vadd.f32 %v829, %v902
        %v904 = vpop.f32.mrf.mxu0
        %905 = vmatprep.mubr.f32.mxu0 0.0
        %906 = vmatmul.mubr.f32.gmra.mxu0 %v794
        %v907 = vpop.f32.mrf.mxu0
        %v908 = vadd.f32 %v829, %v907
        %v909 = vpop.f32.mrf.mxu0
        %910 = vmatprep.mubr.f32.mxu0 0.0
        %911 = vmatmul.mubr.f32.gmra.mxu0 %v795
        %v912 = vpop.f32.mrf.mxu0
        %v913 = vadd.f32 %v829, %v912
        %v914 = vpop.f32.mrf.mxu0
        %915 = vmatprep.mubr.f32.mxu0 0.0
        %916 = vmatmul.mubr.f32.gmra.mxu0 %v796
        %v917 = vpop.f32.mrf.mxu0
        %v918 = vadd.f32 %v829, %v917
        %v919 = vpop.f32.mrf.mxu0
        %920 = vmatprep.mubr.f32.mxu0 0.0
        %921 = vmatmul.mubr.f32.gmra.mxu0 %v797
        %v922 = vpop.f32.mrf.mxu0
        %v923 = vadd.f32 %v829, %v922
        %v924 = vpop.f32.mrf.mxu0
        %925 = vmatprep.mubr.f32.mxu0 0.0
        %926 = vmatmul.mubr.f32.gmra.mxu0 %v798
        %v927 = vpop.f32.mrf.mxu0
        %v928 = vadd.f32 %v829, %v927
        %v929 = vpop.f32.mrf.mxu0
        %930 = vmatprep.mubr.f32.mxu0 0.0
        %931 = vmatmul.mubr.f32.gmra.mxu0 %v799
        %v932 = vpop.f32.mrf.mxu0
        %v933 = vadd.f32 %v829, %v932
        %v934 = vpop.f32.mrf.mxu0
        %935 = vmatprep.mubr.f32.mxu0 0.0
        %936 = vmatmul.mubr.f32.gmra.mxu0 %v800
        %v937 = vpop.f32.mrf.mxu0
        %v938 = vadd.f32 %v829, %v937
        %v939 = vpop.f32.mrf.mxu0
        %940 = vmatprep.mubr.f32.mxu0 0.0
        %941 = vmatmul.mubr.f32.gmra.mxu0 %v801
        %v942 = vpop.f32.mrf.mxu0
        %v943 = vadd.f32 %v829, %v942
        %v944 = vpop.f32.mrf.mxu0
        %945 = vmatprep.mubr.f32.mxu0 0.0
        %946 = vmatmul.mubr.f32.gmra.mxu0 %v802
        %v947 = vpop.f32.mrf.mxu0
        %v948 = vadd.f32 %v829, %v947
        %v949 = vpop.f32.mrf.mxu0
        %950 = vmatprep.mubr.f32.mxu0 0.0
        %951 = vmatmul.mubr.f32.gmra.mxu0 %v803
        %v952 = vpop.f32.mrf.mxu0
        %v953 = vadd.f32 %v829, %v952
        %v954 = vpop.f32.mrf.mxu0
        %955 = vmatprep.mubr.f32.mxu0 0.0
        %956 = vmatmul.mubr.f32.gmra.mxu0 %v804
        %v957 = vpop.f32.mrf.mxu0
        %v958 = vadd.f32 %v829, %v957
        %v959 = vpop.f32.mrf.mxu0
        %960 = vmatprep.mubr.f32.mxu0 0.0
        %961 = vmatmul.mubr.f32.gmra.mxu0 %v805
        %v962 = vpop.f32.mrf.mxu0
        %v963 = vadd.f32 %v829, %v962
        %v964 = vpop.f32.mrf.mxu0
        %965 = vmatprep.mubr.f32.mxu0 0.0
        %966 = vmatmul.mubr.f32.gmra.mxu0 %v806
        %v967 = vpop.f32.mrf.mxu0
        %v968 = vadd.f32 %v829, %v967
        %v969 = vpop.f32.mrf.mxu0
        %970 = vmatprep.mubr.f32.mxu0 0.0
        %971 = vmatmul.mubr.f32.gmra.mxu0 %v807
        %v972 = vpop.f32.mrf.mxu0
        %v973 = vadd.f32 %v829, %v972
        %v974 = vpop.f32.mrf.mxu0
        %975 = vdwg.mxu0
        %976 = vst [vmem:[%s272] sm:$0xff] %v898
        %977 = vst [vmem:[%s272 + $0x8] sm:$0xff] %v903
        %978 = vst [vmem:[%s272 + $0x10] sm:$0xff] %v908
        %979 = vst [vmem:[%s272 + $0x18] sm:$0xff] %v913
        %980 = vst [vmem:[%s272 + $0x20] sm:$0xff] %v918
        %981 = vst [vmem:[%s272 + $0x28] sm:$0xff] %v923
        %982 = vst [vmem:[%s272 + $0x30] sm:$0xff] %v928
        %983 = vst [vmem:[%s272 + $0x38] sm:$0xff] %v933
        %984 = vst [vmem:[%s272 + $0x40] sm:$0xff] %v938
        %985 = vst [vmem:[%s272 + $0x48] sm:$0xff] %v943
        %986 = vst [vmem:[%s272 + $0x50] sm:$0xff] %v948
        %987 = vst [vmem:[%s272 + $0x58] sm:$0xff] %v953
        %988 = vst [vmem:[%s272 + $0x60] sm:$0xff] %v958
        %989 = vst [vmem:[%s272 + $0x68] sm:$0xff] %v963
        %990 = vst [vmem:[%s272 + $0x70] sm:$0xff] %v968
        %991 = vst [vmem:[%s272 + $0x78] sm:$0xff] %v973
        %s992 = sand.u32 %s181, 1
        %s993 = scalar_lea.sflag [#allocation3], %s992
        %s994 = sand.u32 %s181, 1
        %s995 = smul.addr %s994, 128
        %s996 = scalar_lea.vmem [#allocation2], %s995
        // Predicated region
        $region49: #{tpu_custom_call.1} parent=47 // pred_check
          %p997 = pneg %p191
        $region50: #{tpu_custom_call.1} parent=47 // pred_check_branch
          %999 = sbr.rel (%p997) target = $region52
        $region51: #{tpu_custom_call.1} parent=47 // pred_region
          %s1000 = smul.u32 16, %s21
          %s1002 = ssub.s32 2048, 2048
          %1003 = vsyncadd %s993, %s1002
          %s1004 = smul.addr %s1000, 128
          %s1005 = scalar_lea.hbm %s7, %s1004
          %s1006 = sshll.u32 %s996, 4
          %s1007 = int_to_ptr.vmem [resolvable:$true] %s1006
          %1012 = dma.vmem_to_hbm [thread:$0]  %s1007, 2048, %s1005, %s993, 128, 128, 8
        $region52: #{tpu_custom_call.1} parent=47 // pred_fallthru
          _
      $region48: #{tpu_custom_call.1} parent=5 // pred_fallthru
        _
      %p1013 = scmp.le.s32.totalorder 2, %s16
      // Predicated region
      $region53: #{tpu_custom_call.1} parent=5 // pred_check
        %p1014 = pneg %p1013
      $region54: #{tpu_custom_call.1} parent=5 // pred_check_branch
        %1016 = sbr.rel (%p1014) target = $region56
      $region55: #{tpu_custom_call.1} parent=5 // pred_region
        %s1017 = ssub.s32 %s16, 2
        // Predicated region
        $region57: #{tpu_custom_call.1} parent=55 // pred_check
          %p1018 = pneg %p197
        $region58: #{tpu_custom_call.1} parent=55 // pred_check_branch
          %1020 = sbr.rel (%p1018) target = $region60
        $region59: #{tpu_custom_call.1} parent=55 // pred_region
          %s1021 = sand.u32 %s182, 1
          %s1022 = scalar_lea.sflag [#allocation3], %s1021
          %s1023 = sand.u32 %s182, 1
          %s1024 = smul.addr %s1023, 128
          %s1025 = scalar_lea.vmem [#allocation2], %s1024
          %1026 = dma.done %s1022, 2048
        $region60: #{tpu_custom_call.1} parent=55 // pred_fallthru
          _
      $region56: #{tpu_custom_call.1} parent=5 // pred_fallthru
        _
    $region6: #{tpu_custom_call.1} parent=1 // loop_footer
      %s20 = sadd.s32 1, %s16
    $region7: #{tpu_custom_call.1} parent=1 // loop_footer_branch
      %15 = sbr.rel target = $region3
    $region8: #{tpu_custom_call.1} parent=1 // loop_exit
      _
    %1027 = vsyncpa [#allocation3], 1
    %s1028 = scalar_lea.sflag [#allocation3], 1
    %1029 = vsyncpa %s1028, 1

</llo_original>
